<compile_context>
chip_gen: v7x
topology: tpu7x:2x2x1
jax: 0.10.0
libtpu: 0.0.40
codegen_flags: <defaults>
</compile_context>

<pallas_src>
import functools
import math

import jax
import jax.numpy as jnp
from jax.experimental import pallas as pl
from jax.experimental.pallas import tpu as pltpu


def mha_kernel(q_ref, k_ref, v_ref,
               wq_ref, wk_ref, bk_ref, wv_ref, bv_ref,
               wo_ref, bo_ref, gamma_ref, beta_ref,
               out_ref, *, eps):
    Bt, S, d_model = q_ref.shape
    hd = wq_ref.shape[1]

    # Flatten the batch block so each projection is a single (Bt*S, d_model)
    # x (d_model, hd) MXU matmul (bigger M per matmul, one bias add each).
    # (Bt, S, d_model) -> (Bt*S, d_model) only stacks whole (8,128) tiles along
    # sublanes, so it is a layout-preserving reshape.
    q2 = q_ref[...].reshape(Bt * S, d_model)
    k2 = k_ref[...].reshape(Bt * S, d_model)
    v2 = v_ref[...].reshape(Bt * S, d_model)

    # Wq is pre-scaled by 1/sqrt(d_head) in the wrapper; q projection has no bias.
    Q = jnp.dot(q2, wq_ref[...], preferred_element_type=jnp.float32)
    K = jnp.dot(k2, wk_ref[...], preferred_element_type=jnp.float32) + bk_ref[...]
    V = jnp.dot(v2, wv_ref[...], preferred_element_type=jnp.float32) + bv_ref[...]

    Qb = Q.reshape(Bt, S, hd)
    Kb = K.reshape(Bt, S, hd)
    Vb = V.reshape(Bt, S, hd)

    # Merged-head attention scores.  NT-form batched einsum: contraction over
    # the full hd axis handled inside the MXU issue, no explicit transpose.
    scores = jnp.einsum("bid,bjd->bij", Qb, Kb,
                        preferred_element_type=jnp.float32)      # (Bt, S, S)

    # Numerically-stable f32 softmax; the divide goes to the EUP as a reciprocal.
    m = jnp.max(scores, axis=-1, keepdims=True)
    e = jnp.exp(scores - m)
    denom = jnp.sum(e, axis=-1, keepdims=True)
    probs = e * pl.reciprocal(denom, approx=True)
    # TODO(synk): att_drop / hid_drop / drop_path are identity in eval mode;
    # training-mode stochastic dropout is not implemented.

    ctx = jnp.einsum("bij,bjd->bid", probs, Vb,
                     preferred_element_type=jnp.float32)         # (Bt, S, hd)

    attn_out = (jnp.dot(ctx.reshape(Bt * S, hd), wo_ref[...],
                        preferred_element_type=jnp.float32)
                + bo_ref[...])                                   # (Bt*S, d_model)

    # Residual + LayerNorm(d_model) with PyTorch-default eps; rsqrt on EUP.
    x = q2.astype(jnp.float32) + attn_out
    mu = jnp.mean(x, axis=-1, keepdims=True)
    xc = x - mu
    var = jnp.mean(xc * xc, axis=-1, keepdims=True)
    y = xc * jax.lax.rsqrt(var + eps) * gamma_ref[...] + beta_ref[...]

    out_ref[...] = y.reshape(Bt, S, d_model).astype(out_ref.dtype)


def _choose_batch_block(B, S, d_model, hd, budget_bytes=6 * 1024 * 1024):
    # Rough per-step f32 VMEM estimate: double-buffered q/k/v/out blocks plus
    # in-kernel temporaries (Q/K/V, scores, ctx).  Pick the largest divisor of
    # B that fits, so the grid (and its ~0.35us/step overhead) stays short.
    for bt in range(B, 0, -1):
        if B % bt:
            continue
        per_row = 4 * (2 * 4 * d_model + 3 * hd + bt * S + hd + d_model)
        if bt * S * per_row <= budget_bytes:
            return bt
    return 1


def multihead_attention(q, k, v, params, *, d_head, eps=1e-5, batch_block=None):
    """Mirrors MultiheadAttention.forward(q, k, v) with batch-first (B,S,d_model) inputs."""
    B, S, d_model = q.shape
    wq, wk, bk, wv, bv, wo, bo, gamma, beta = params
    hd = wq.shape[1]

    # Fold the 1/sqrt(d_head) attention scale into Wq (q projection is bias-free,
    # so this is exact); done once on the (static) weight, not per-activation.
    wq_scaled = (wq * (1.0 / math.sqrt(float(d_head)))).astype(wq.dtype)

    if batch_block is None:
        batch_block = _choose_batch_block(B, S, d_model, hd)
    assert B % batch_block == 0, "batch_block must divide B"
    Bt = batch_block

    act_spec = pl.BlockSpec((Bt, S, d_model), lambda b: (b, 0, 0))

    def full2d(arr):
        # Full-array block with a constant index_map: DMA'd once, stays resident.
        return pl.BlockSpec(arr.shape, lambda b: (0, 0))

    kernel = functools.partial(mha_kernel, eps=eps)

    return pl.pallas_call(
        kernel,
        out_shape=jax.ShapeDtypeStruct((B, S, d_model), q.dtype),
        grid_spec=pltpu.PrefetchScalarGridSpec(
            num_scalar_prefetch=0,
            grid=(B // Bt,),
            in_specs=[
                act_spec,                 # q
                act_spec,                 # k
                act_spec,                 # v
                full2d(wq_scaled),        # Wq (pre-scaled, no bias)
                full2d(wk), full2d(bk),   # Wk, bk
                full2d(wv), full2d(bv),   # Wv, bv
                full2d(wo), full2d(bo),   # Wo, bo
                full2d(gamma), full2d(beta),
            ],
            out_specs=act_spec,
        ),
        compiler_params=pltpu.CompilerParams(
            dimension_semantics=("parallel",)),
    )(q, k, v, wq_scaled, wk, bk, wv, bv, wo, bo, gamma, beta)


def reference_forward(q, k, v, params, *, d_head, eps=1e-5):
    """Pure-JAX reference of the PyTorch forward (eval mode, batch-first inputs)."""
    wq, wk, bk, wv, bv, wo, bo, gamma, beta = params
    scale = 1.0 / math.sqrt(float(d_head))

    Q = (q @ wq) * scale
    K = k @ wk + bk[0]
    V = v @ wv + bv[0]

    scores = jnp.einsum("bid,bjd->bij", Q, K)        # full hd contraction, as written
    probs = jax.nn.softmax(scores.astype(jnp.float32), axis=-1)
    ctx = jnp.einsum("bij,bjd->bid", probs, V)
    attn_out = ctx @ wo + bo[0]

    x = q + attn_out
    mu = jnp.mean(x, axis=-1, keepdims=True)
    var = jnp.mean((x - mu) ** 2, axis=-1, keepdims=True)
    return (x - mu) / jnp.sqrt(var + eps) * gamma[0] + beta[0]


if __name__ == "__main__":
    # Small, lane-dense config: d_model = n_head * d_head = 128.
    B, S = 2, 8
    d_model = 128
    n_head, d_head = 4, 32
    hd = n_head * d_head

    root = jax.random.PRNGKey(0)
    keys = jax.random.split(root, 16)

    def init_w(kw, fan_in, fan_out):
        return jax.random.normal(kw, (fan_in, fan_out), jnp.float32) * 0.05

    def init_b(kb, fan_out):
        return jax.random.normal(kb, (1, fan_out), jnp.float32) * 0.01

    wq = init_w(keys[0], d_model, hd)                   # q_head: bias=False
    wk, bk = init_w(keys[1], d_model, hd), init_b(keys[2], hd)
    wv, bv = init_w(keys[3], d_model, hd), init_b(keys[4], hd)
    wo, bo = init_w(keys[5], hd, d_model), init_b(keys[6], d_model)
    gamma = 1.0 + 0.1 * jax.random.normal(keys[7], (1, d_model), jnp.float32)
    beta = 0.02 * jax.random.normal(keys[8], (1, d_model), jnp.float32)
    params = (wq, wk, bk, wv, bv, wo, bo, gamma, beta)

    q = jax.random.normal(keys[9], (B, S, d_model), jnp.float32)
    k = jax.random.normal(keys[10], (B, S, d_model), jnp.float32)
    v = jax.random.normal(keys[11], (B, S, d_model), jnp.float32)

    out = multihead_attention(q, k, v, params, d_head=d_head)
    out = jax.block_until_ready(out)

    ref = reference_forward(q, k, v, params, d_head=d_head)
    assert out.shape == (B, S, d_model)
    # Tolerance accounts for the EUP approx-reciprocal softmax denominator.
    assert jnp.allclose(out, ref, atol=5e-3, rtol=5e-3), "mismatch vs reference"

    print("KERNEL_OK")
</pallas_src>

<mosaic_0001>
module attributes {stable_mosaic.version = 11 : i64} {
  func.func @mha_kernel(%arg0: i32, %arg1: memref<2x8x128xf32, #tpu.memory_space<vmem>>, %arg2: memref<2x8x128xf32, #tpu.memory_space<vmem>>, %arg3: memref<2x8x128xf32, #tpu.memory_space<vmem>>, %arg4: memref<128x128xf32, #tpu.memory_space<vmem>>, %arg5: memref<128x128xf32, #tpu.memory_space<vmem>>, %arg6: memref<1x128xf32, #tpu.memory_space<vmem>>, %arg7: memref<128x128xf32, #tpu.memory_space<vmem>>, %arg8: memref<1x128xf32, #tpu.memory_space<vmem>>, %arg9: memref<128x128xf32, #tpu.memory_space<vmem>>, %arg10: memref<1x128xf32, #tpu.memory_space<vmem>>, %arg11: memref<1x128xf32, #tpu.memory_space<vmem>>, %arg12: memref<1x128xf32, #tpu.memory_space<vmem>>, %arg13: memref<2x8x128xf32, #tpu.memory_space<vmem>>) attributes {dimension_semantics = [#tpu.dimension_semantics<parallel>], iteration_bounds = array<i64: 1>, scalar_prefetch = 0 : i64, scratch_operands = 0 : i64, tpu.core_type = #tpu.core_type<tc>, window_params = [{transform_indices = @transform_0, window_bounds = array<i64: 2, 8, 128>}, {transform_indices = @transform_1, window_bounds = array<i64: 2, 8, 128>}, {transform_indices = @transform_2, window_bounds = array<i64: 2, 8, 128>}, {pipeline_mode = #tpu.pipeline_mode<synchronous>, transform_indices = @transform_3, window_bounds = array<i64: 128, 128>}, {pipeline_mode = #tpu.pipeline_mode<synchronous>, transform_indices = @transform_4, window_bounds = array<i64: 128, 128>}, {pipeline_mode = #tpu.pipeline_mode<synchronous>, transform_indices = @transform_5, window_bounds = array<i64: 1, 128>}, {pipeline_mode = #tpu.pipeline_mode<synchronous>, transform_indices = @transform_6, window_bounds = array<i64: 128, 128>}, {pipeline_mode = #tpu.pipeline_mode<synchronous>, transform_indices = @transform_7, window_bounds = array<i64: 1, 128>}, {pipeline_mode = #tpu.pipeline_mode<synchronous>, transform_indices = @transform_8, window_bounds = array<i64: 128, 128>}, {pipeline_mode = #tpu.pipeline_mode<synchronous>, transform_indices = @transform_9, window_bounds = array<i64: 1, 128>}, {pipeline_mode = #tpu.pipeline_mode<synchronous>, transform_indices = @transform_10, window_bounds = array<i64: 1, 128>}, {pipeline_mode = #tpu.pipeline_mode<synchronous>, transform_indices = @transform_11, window_bounds = array<i64: 1, 128>}, {transform_indices = @transform_12, window_bounds = array<i64: 2, 8, 128>}]} {
    %c0 = arith.constant 0 : index
    %c0_0 = arith.constant 0 : index
    %c0_1 = arith.constant 0 : index
    %0 = vector.load %arg1[%c0, %c0_0, %c0_1] : memref<2x8x128xf32, #tpu.memory_space<vmem>>, vector<2x8x128xf32>
    %1 = vector.shape_cast %0 : vector<2x8x128xf32> to vector<16x128xf32>
    %c0_2 = arith.constant 0 : index
    %c0_3 = arith.constant 0 : index
    %c0_4 = arith.constant 0 : index
    %2 = vector.load %arg2[%c0_2, %c0_3, %c0_4] : memref<2x8x128xf32, #tpu.memory_space<vmem>>, vector<2x8x128xf32>
    %3 = vector.shape_cast %2 : vector<2x8x128xf32> to vector<16x128xf32>
    %c0_5 = arith.constant 0 : index
    %c0_6 = arith.constant 0 : index
    %c0_7 = arith.constant 0 : index
    %4 = vector.load %arg3[%c0_5, %c0_6, %c0_7] : memref<2x8x128xf32, #tpu.memory_space<vmem>>, vector<2x8x128xf32>
    %5 = vector.shape_cast %4 : vector<2x8x128xf32> to vector<16x128xf32>
    %c0_8 = arith.constant 0 : index
    %c0_9 = arith.constant 0 : index
    %6 = vector.load %arg4[%c0_8, %c0_9] : memref<128x128xf32, #tpu.memory_space<vmem>>, vector<128x128xf32>
    %cst = arith.constant dense<0.000000e+00> : vector<16x128xf32>
    %7 = tpu.matmul %1, %6, %cst {dimension_numbers = #tpu.dot_dimension_numbers<[1], [0], [0], [1], [0, 0, 1, 1], [], []>} : vector<16x128xf32>, vector<128x128xf32>, vector<16x128xf32> -> vector<16x128xf32>
    %c0_10 = arith.constant 0 : index
    %c0_11 = arith.constant 0 : index
    %8 = vector.load %arg5[%c0_10, %c0_11] : memref<128x128xf32, #tpu.memory_space<vmem>>, vector<128x128xf32>
    %cst_12 = arith.constant dense<0.000000e+00> : vector<16x128xf32>
    %9 = tpu.matmul %3, %8, %cst_12 {dimension_numbers = #tpu.dot_dimension_numbers<[1], [0], [0], [1], [0, 0, 1, 1], [], []>} : vector<16x128xf32>, vector<128x128xf32>, vector<16x128xf32> -> vector<16x128xf32>
    %c0_13 = arith.constant 0 : index
    %c0_14 = arith.constant 0 : index
    %10 = vector.load %arg6[%c0_13, %c0_14] : memref<1x128xf32, #tpu.memory_space<vmem>>, vector<1x128xf32>
    %11 = vector.broadcast %10 : vector<1x128xf32> to vector<16x128xf32>
    %12 = arith.addf %9, %11 : vector<16x128xf32>
    %c0_15 = arith.constant 0 : index
    %c0_16 = arith.constant 0 : index
    %13 = vector.load %arg7[%c0_15, %c0_16] : memref<128x128xf32, #tpu.memory_space<vmem>>, vector<128x128xf32>
    %cst_17 = arith.constant dense<0.000000e+00> : vector<16x128xf32>
    %14 = tpu.matmul %5, %13, %cst_17 {dimension_numbers = #tpu.dot_dimension_numbers<[1], [0], [0], [1], [0, 0, 1, 1], [], []>} : vector<16x128xf32>, vector<128x128xf32>, vector<16x128xf32> -> vector<16x128xf32>
    %c0_18 = arith.constant 0 : index
    %c0_19 = arith.constant 0 : index
    %15 = vector.load %arg8[%c0_18, %c0_19] : memref<1x128xf32, #tpu.memory_space<vmem>>, vector<1x128xf32>
    %16 = vector.broadcast %15 : vector<1x128xf32> to vector<16x128xf32>
    %17 = arith.addf %14, %16 : vector<16x128xf32>
    %18 = vector.shape_cast %7 : vector<16x128xf32> to vector<2x8x128xf32>
    %19 = vector.shape_cast %12 : vector<16x128xf32> to vector<2x8x128xf32>
    %20 = vector.shape_cast %17 : vector<16x128xf32> to vector<2x8x128xf32>
    "tpu.trace_start"() <{level = 10 : i32, message = "bid,bjd->bij"}> : () -> ()
    %cst_20 = arith.constant dense<0.000000e+00> : vector<2x8x8xf32>
    %21 = tpu.matmul %18, %19, %cst_20 {dimension_numbers = #tpu.dot_dimension_numbers<[2], [2], [1], [1], [0, 0, 0, 1, 1, 1], [0], [0]>} : vector<2x8x128xf32>, vector<2x8x128xf32>, vector<2x8x8xf32> -> vector<2x8x8xf32>
    "tpu.trace_stop"() : () -> ()
    %cst_21 = arith.constant dense<0xFF800000> : vector<2x8xf32>
    %22 = vector.multi_reduction <maximumf>, %21, %cst_21 [2] : vector<2x8x8xf32> to vector<2x8xf32>
    %23 = vector.shape_cast %22 : vector<2x8xf32> to vector<2x8x1xf32>
    %24 = vector.broadcast %23 : vector<2x8x1xf32> to vector<2x8x8xf32>
    %25 = arith.subf %21, %24 : vector<2x8x8xf32>
    %26 = math.exp %25 : vector<2x8x8xf32>
    %cst_22 = arith.constant dense<0.000000e+00> : vector<2x8xf32>
    %27 = vector.multi_reduction <add>, %26, %cst_22 [2] : vector<2x8x8xf32> to vector<2x8xf32>
    %28 = vector.shape_cast %27 : vector<2x8xf32> to vector<2x8x1xf32>
    %29 = tpu.reciprocal %28 {approx = true} : vector<2x8x1xf32> -> vector<2x8x1xf32>
    %30 = vector.broadcast %29 : vector<2x8x1xf32> to vector<2x8x8xf32>
    %31 = arith.mulf %26, %30 : vector<2x8x8xf32>
    "tpu.trace_start"() <{level = 10 : i32, message = "bij,bjd->bid"}> : () -> ()
    %cst_23 = arith.constant dense<0.000000e+00> : vector<2x8x128xf32>
    %32 = tpu.matmul %31, %20, %cst_23 {dimension_numbers = #tpu.dot_dimension_numbers<[2], [1], [1], [2], [0, 0, 0, 1, 1, 2], [0], [0]>} : vector<2x8x8xf32>, vector<2x8x128xf32>, vector<2x8x128xf32> -> vector<2x8x128xf32>
    "tpu.trace_stop"() : () -> ()
    %33 = vector.shape_cast %32 : vector<2x8x128xf32> to vector<16x128xf32>
    %c0_24 = arith.constant 0 : index
    %c0_25 = arith.constant 0 : index
    %34 = vector.load %arg9[%c0_24, %c0_25] : memref<128x128xf32, #tpu.memory_space<vmem>>, vector<128x128xf32>
    %cst_26 = arith.constant dense<0.000000e+00> : vector<16x128xf32>
    %35 = tpu.matmul %33, %34, %cst_26 {dimension_numbers = #tpu.dot_dimension_numbers<[1], [0], [0], [1], [0, 0, 1, 1], [], []>} : vector<16x128xf32>, vector<128x128xf32>, vector<16x128xf32> -> vector<16x128xf32>
    %c0_27 = arith.constant 0 : index
    %c0_28 = arith.constant 0 : index
    %36 = vector.load %arg10[%c0_27, %c0_28] : memref<1x128xf32, #tpu.memory_space<vmem>>, vector<1x128xf32>
    %37 = vector.broadcast %36 : vector<1x128xf32> to vector<16x128xf32>
    %38 = arith.addf %35, %37 : vector<16x128xf32>
    %39 = arith.addf %1, %38 : vector<16x128xf32>
    %cst_29 = arith.constant dense<0.000000e+00> : vector<16xf32>
    %40 = vector.multi_reduction <add>, %39, %cst_29 [1] : vector<16x128xf32> to vector<16xf32>
    %41 = vector.shape_cast %40 : vector<16xf32> to vector<16x1xf32>
    %cst_30 = arith.constant 1.280000e+02 : f32
    %42 = vector.broadcast %cst_30 : f32 to vector<16x1xf32>
    %43 = arith.divf %41, %42 : vector<16x1xf32>
    %44 = vector.broadcast %43 : vector<16x1xf32> to vector<16x128xf32>
    %45 = arith.subf %39, %44 : vector<16x128xf32>
    %46 = arith.mulf %45, %45 : vector<16x128xf32>
    %cst_31 = arith.constant dense<0.000000e+00> : vector<16xf32>
    %47 = vector.multi_reduction <add>, %46, %cst_31 [1] : vector<16x128xf32> to vector<16xf32>
    %48 = vector.shape_cast %47 : vector<16xf32> to vector<16x1xf32>
    %cst_32 = arith.constant 1.280000e+02 : f32
    %49 = vector.broadcast %cst_32 : f32 to vector<16x1xf32>
    %50 = arith.divf %48, %49 : vector<16x1xf32>
    %cst_33 = arith.constant 9.99999974E-6 : f32
    %51 = vector.broadcast %cst_33 : f32 to vector<16x1xf32>
    %52 = arith.addf %50, %51 : vector<16x1xf32>
    %53 = math.rsqrt %52 : vector<16x1xf32>
    %54 = vector.broadcast %53 : vector<16x1xf32> to vector<16x128xf32>
    %55 = arith.mulf %45, %54 : vector<16x128xf32>
    %c0_34 = arith.constant 0 : index
    %c0_35 = arith.constant 0 : index
    %56 = vector.load %arg11[%c0_34, %c0_35] : memref<1x128xf32, #tpu.memory_space<vmem>>, vector<1x128xf32>
    %57 = vector.broadcast %56 : vector<1x128xf32> to vector<16x128xf32>
    %58 = arith.mulf %55, %57 : vector<16x128xf32>
    %c0_36 = arith.constant 0 : index
    %c0_37 = arith.constant 0 : index
    %59 = vector.load %arg12[%c0_36, %c0_37] : memref<1x128xf32, #tpu.memory_space<vmem>>, vector<1x128xf32>
    %60 = vector.broadcast %59 : vector<1x128xf32> to vector<16x128xf32>
    %61 = arith.addf %58, %60 : vector<16x128xf32>
    %62 = vector.shape_cast %61 : vector<16x128xf32> to vector<2x8x128xf32>
    %c0_38 = arith.constant 0 : index
    %c0_39 = arith.constant 0 : index
    %c0_40 = arith.constant 0 : index
    %63 = vector.load %arg13[%c0_38, %c0_39, %c0_40] : memref<2x8x128xf32, #tpu.memory_space<vmem>>, vector<2x8x128xf32>
    tpu.vector_store %arg13[%c0_38, %c0_39, %c0_40], %62 {strides = array<i32>} : memref<2x8x128xf32, #tpu.memory_space<vmem>>, vector<2x8x128xf32>,
    return
  }
  func.func @transform_0(%arg0: i32) -> (i32, i32, i32) {
    %c0_i32 = arith.constant 0 : i32
    %c0_i32_0 = arith.constant 0 : i32
    %c0_i32_1 = arith.constant 0 : i32
    return %arg0, %c0_i32, %c0_i32_0 : i32, i32, i32
  }
  func.func @transform_1(%arg0: i32) -> (i32, i32, i32) {
    %c0_i32 = arith.constant 0 : i32
    %c0_i32_0 = arith.constant 0 : i32
    %c0_i32_1 = arith.constant 0 : i32
    return %arg0, %c0_i32, %c0_i32_0 : i32, i32, i32
  }
  func.func @transform_2(%arg0: i32) -> (i32, i32, i32) {
    %c0_i32 = arith.constant 0 : i32
    %c0_i32_0 = arith.constant 0 : i32
    %c0_i32_1 = arith.constant 0 : i32
    return %arg0, %c0_i32, %c0_i32_0 : i32, i32, i32
  }
  func.func @transform_3(%arg0: i32) -> (i32, i32) {
    %c0_i32 = arith.constant 0 : i32
    %c0_i32_0 = arith.constant 0 : i32
    %c0_i32_1 = arith.constant 0 : i32
    return %c0_i32, %c0_i32_0 : i32, i32
  }
  func.func @transform_4(%arg0: i32) -> (i32, i32) {
    %c0_i32 = arith.constant 0 : i32
    %c0_i32_0 = arith.constant 0 : i32
    %c0_i32_1 = arith.constant 0 : i32
    return %c0_i32, %c0_i32_0 : i32, i32
  }
  func.func @transform_5(%arg0: i32) -> (i32, i32) {
    %c0_i32 = arith.constant 0 : i32
    %c0_i32_0 = arith.constant 0 : i32
    %c0_i32_1 = arith.constant 0 : i32
    return %c0_i32, %c0_i32_0 : i32, i32
  }
  func.func @transform_6(%arg0: i32) -> (i32, i32) {
    %c0_i32 = arith.constant 0 : i32
    %c0_i32_0 = arith.constant 0 : i32
    %c0_i32_1 = arith.constant 0 : i32
    return %c0_i32, %c0_i32_0 : i32, i32
  }
  func.func @transform_7(%arg0: i32) -> (i32, i32) {
    %c0_i32 = arith.constant 0 : i32
    %c0_i32_0 = arith.constant 0 : i32
    %c0_i32_1 = arith.constant 0 : i32
    return %c0_i32, %c0_i32_0 : i32, i32
  }
  func.func @transform_8(%arg0: i32) -> (i32, i32) {
    %c0_i32 = arith.constant 0 : i32
    %c0_i32_0 = arith.constant 0 : i32
    %c0_i32_1 = arith.constant 0 : i32
    return %c0_i32, %c0_i32_0 : i32, i32
  }
  func.func @transform_9(%arg0: i32) -> (i32, i32) {
    %c0_i32 = arith.constant 0 : i32
    %c0_i32_0 = arith.constant 0 : i32
    %c0_i32_1 = arith.constant 0 : i32
    return %c0_i32, %c0_i32_0 : i32, i32
  }
  func.func @transform_10(%arg0: i32) -> (i32, i32) {
    %c0_i32 = arith.constant 0 : i32
    %c0_i32_0 = arith.constant 0 : i32
    %c0_i32_1 = arith.constant 0 : i32
    return %c0_i32, %c0_i32_0 : i32, i32
  }
  func.func @transform_11(%arg0: i32) -> (i32, i32) {
    %c0_i32 = arith.constant 0 : i32
    %c0_i32_0 = arith.constant 0 : i32
    %c0_i32_1 = arith.constant 0 : i32
    return %c0_i32, %c0_i32_0 : i32, i32
  }
  func.func @transform_12(%arg0: i32) -> (i32, i32, i32) {
    %c0_i32 = arith.constant 0 : i32
    %c0_i32_0 = arith.constant 0 : i32
    %c0_i32_1 = arith.constant 0 : i32
    return %arg0, %c0_i32, %c0_i32_0 : i32, i32, i32
  }
}

</mosaic_0001>

<llo_original>
// kernel: tpu_custom_call.1
$region0: #{tpu_custom_call.1}
  #allocation0 [shape = 'u32[]', space=smem, size = 0x4, offset = 0x4, fixed_abs, tag = 'smem constant byte address 0x4 - core index']
  #allocation1 [shape = 'u32[144,128]{1,0:T(1,128)}', space=vmem, size = 0x12000, scoped, tag = 'internal scratch']
  %s0 = inlined_call_operand.hbm [shape: f32[2,8,128], index: 0, kind: input, shape index: {}]
  %s1 = inlined_call_operand.hbm [shape: f32[2,8,128], index: 1, kind: input, shape index: {}]
  %s2 = inlined_call_operand.hbm [shape: f32[2,8,128], index: 2, kind: input, shape index: {}]
  %s3 = inlined_call_operand.hbm [shape: f32[128,128], index: 3, kind: input, shape index: {}]
  %s4 = inlined_call_operand.hbm [shape: f32[128,128], index: 4, kind: input, shape index: {}]
  %s5 = inlined_call_operand.vmem [shape: f32[1,128], index: 5, kind: input, shape index: {}]
  %s6 = inlined_call_operand.hbm [shape: f32[128,128], index: 6, kind: input, shape index: {}]
  %s7 = inlined_call_operand.vmem [shape: f32[1,128], index: 7, kind: input, shape index: {}]
  %s8 = inlined_call_operand.hbm [shape: f32[128,128], index: 8, kind: input, shape index: {}]
  %s9 = inlined_call_operand.vmem [shape: f32[1,128], index: 9, kind: input, shape index: {}]
  %s10 = inlined_call_operand.vmem [shape: f32[1,128], index: 10, kind: input, shape index: {}]
  %s11 = inlined_call_operand.vmem [shape: f32[1,128], index: 11, kind: input, shape index: {}]
  %s12 = inlined_call_operand.hbm [shape: f32[2,8,128], index: 12, kind: output, shape index: {}]
  %s13 = sld [smem:[#allocation0]]
  $region86: #{tpu_custom_call.1} parent=0
    _
  %s15 = ssub.s32 1, %s13
  %s16 = scalar_select 0, %s15, %s13
  $region1: #{tpu_custom_call.1} parent=0
    #allocation2 [shape = 'u8[8192]{0}', space=vmem, size = 0x2000, scoped, tag = 'input window, operand 0, single buffered']
    #allocation3 [shape = 's32[1]{0}', space=sflag, size = 0x4, scoped, tag = 'scoped memory for tpu_custom_call.1']
    #allocation4 [shape = 's32[1]{0}', space=sflag, size = 0x4, scoped, tag = 'scoped memory for tpu_custom_call.1']
    #allocation5 [shape = 'u8[8192]{0}', space=vmem, size = 0x2000, scoped, tag = 'input window, operand 1, single buffered']
    #allocation6 [shape = 's32[1]{0}', space=sflag, size = 0x4, scoped, tag = 'scoped memory for tpu_custom_call.1']
    #allocation7 [shape = 'u8[8192]{0}', space=vmem, size = 0x2000, scoped, tag = 'input window, operand 2, single buffered']
    #allocation8 [shape = 'u8[65536]{0}', space=vmem, size = 0x10000, scoped, tag = 'input window, operand 3, single buffered']
    #allocation9 [shape = 's32[1]{0}', space=sflag, size = 0x4, scoped, tag = 'scoped memory for tpu_custom_call.1']
    #allocation10 [shape = 'u8[65536]{0}', space=vmem, size = 0x10000, scoped, tag = 'input window, operand 4, single buffered']
    #allocation11 [shape = 'u8[65536]{0}', space=vmem, size = 0x10000, scoped, tag = 'input window, operand 6, single buffered']
    #allocation12 [shape = 's32[1]{0}', space=sflag, size = 0x4, scoped, tag = 'scoped memory for tpu_custom_call.1']
    #allocation13 [shape = 'u8[65536]{0}', space=vmem, size = 0x10000, scoped, tag = 'input window, operand 8, single buffered']
    #allocation14 [shape = 'u8[8192]{0}', space=vmem, size = 0x2000, scoped, tag = 'output window, operand 0, single buffered']
    %17 = vsyncpa [#allocation3], 0
    %18 = vsyncpa [#allocation6], 0
    %19 = vsyncpa [#allocation9], 0
    %20 = vsyncpa [#allocation12], 0
    %21 = vsyncpa [#allocation4], 0
    // Predicated region
    $region2: #{tpu_custom_call.1} parent=1 // pred_check
      _
    $region3: #{tpu_custom_call.1} parent=1 // pred_check_branch
      %23 = sbr.rel (0) target = $region5
    $region4: #{tpu_custom_call.1} parent=1 // pred_region
      %s25 = ssub.s32 256, 256
      %26 = vsyncadd [#allocation3], %s25
      %s27 = sshll.u32 [#allocation2], 4
      %s28 = int_to_ptr.vmem [resolvable:$true] %s27
      %33 = dma.hbm_to_vmem [thread:$0]  %s0, 256, %s28, [#allocation3], 128, 128, 8
    $region5: #{tpu_custom_call.1} parent=1 // pred_fallthru
      _
    // Predicated region
    $region6: #{tpu_custom_call.1} parent=1 // pred_check
      _
    $region7: #{tpu_custom_call.1} parent=1 // pred_check_branch
      %35 = sbr.rel (0) target = $region9
    $region8: #{tpu_custom_call.1} parent=1 // pred_region
      %s37 = ssub.s32 256, 256
      %38 = vsyncadd [#allocation6], %s37
      %s39 = sshll.u32 [#allocation5], 4
      %s40 = int_to_ptr.vmem [resolvable:$true] %s39
      %45 = dma.hbm_to_vmem [thread:$0]  %s1, 256, %s40, [#allocation6], 128, 128, 8
    $region9: #{tpu_custom_call.1} parent=1 // pred_fallthru
      _
    // Predicated region
    $region10: #{tpu_custom_call.1} parent=1 // pred_check
      _
    $region11: #{tpu_custom_call.1} parent=1 // pred_check_branch
      %47 = sbr.rel (0) target = $region13
    $region12: #{tpu_custom_call.1} parent=1 // pred_region
      %s49 = ssub.s32 256, 256
      %50 = vsyncadd [#allocation6], %s49
      %s51 = sshll.u32 [#allocation7], 4
      %s52 = int_to_ptr.vmem [resolvable:$true] %s51
      %57 = dma.hbm_to_vmem [thread:$0]  %s2, 256, %s52, [#allocation6], 128, 128, 8
    $region13: #{tpu_custom_call.1} parent=1 // pred_fallthru
      _
    // Predicated region
    $region14: #{tpu_custom_call.1} parent=1 // pred_check
      _
    $region15: #{tpu_custom_call.1} parent=1 // pred_check_branch
      %59 = sbr.rel (0) target = $region17
    $region16: #{tpu_custom_call.1} parent=1 // pred_region
      %s61 = ssub.s32 2048, 2048
      %62 = vsyncadd [#allocation9], %s61
      %s63 = sshll.u32 [#allocation8], 4
      %s64 = int_to_ptr.vmem [resolvable:$true] %s63
      %69 = dma.hbm_to_vmem [thread:$0]  %s3, 2048, %s64, [#allocation9], 128, 128, 8
    $region17: #{tpu_custom_call.1} parent=1 // pred_fallthru
      _
    // Predicated region
    $region18: #{tpu_custom_call.1} parent=1 // pred_check
      _
    $region19: #{tpu_custom_call.1} parent=1 // pred_check_branch
      %71 = sbr.rel (0) target = $region21
    $region20: #{tpu_custom_call.1} parent=1 // pred_region
      %s73 = ssub.s32 2048, 2048
      %74 = vsyncadd [#allocation9], %s73
      %s75 = sshll.u32 [#allocation10], 4
      %s76 = int_to_ptr.vmem [resolvable:$true] %s75
      %81 = dma.hbm_to_vmem [thread:$0]  %s4, 2048, %s76, [#allocation9], 128, 128, 8
    $region21: #{tpu_custom_call.1} parent=1 // pred_fallthru
      _
    // Predicated region
    $region22: #{tpu_custom_call.1} parent=1 // pred_check
      _
    $region23: #{tpu_custom_call.1} parent=1 // pred_check_branch
      %83 = sbr.rel (0) target = $region25
    $region24: #{tpu_custom_call.1} parent=1 // pred_region
      _
    $region25: #{tpu_custom_call.1} parent=1 // pred_fallthru
      _
    // Predicated region
    $region26: #{tpu_custom_call.1} parent=1 // pred_check
      _
    $region27: #{tpu_custom_call.1} parent=1 // pred_check_branch
      %85 = sbr.rel (0) target = $region29
    $region28: #{tpu_custom_call.1} parent=1 // pred_region
      %s87 = ssub.s32 2048, 2048
      %88 = vsyncadd [#allocation12], %s87
      %s89 = sshll.u32 [#allocation11], 4
      %s90 = int_to_ptr.vmem [resolvable:$true] %s89
      %95 = dma.hbm_to_vmem [thread:$0]  %s6, 2048, %s90, [#allocation12], 128, 128, 8
    $region29: #{tpu_custom_call.1} parent=1 // pred_fallthru
      _
    // Predicated region
    $region30: #{tpu_custom_call.1} parent=1 // pred_check
      _
    $region31: #{tpu_custom_call.1} parent=1 // pred_check_branch
      %97 = sbr.rel (0) target = $region33
    $region32: #{tpu_custom_call.1} parent=1 // pred_region
      _
    $region33: #{tpu_custom_call.1} parent=1 // pred_fallthru
      _
    // Predicated region
    $region34: #{tpu_custom_call.1} parent=1 // pred_check
      _
    $region35: #{tpu_custom_call.1} parent=1 // pred_check_branch
      %99 = sbr.rel (0) target = $region37
    $region36: #{tpu_custom_call.1} parent=1 // pred_region
      %s101 = ssub.s32 2048, 2048
      %102 = vsyncadd [#allocation12], %s101
      %s103 = sshll.u32 [#allocation13], 4
      %s104 = int_to_ptr.vmem [resolvable:$true] %s103
      %109 = dma.hbm_to_vmem [thread:$0]  %s8, 2048, %s104, [#allocation12], 128, 128, 8
    $region37: #{tpu_custom_call.1} parent=1 // pred_fallthru
      _
    // Predicated region
    $region38: #{tpu_custom_call.1} parent=1 // pred_check
      _
    $region39: #{tpu_custom_call.1} parent=1 // pred_check_branch
      %111 = sbr.rel (0) target = $region41
    $region40: #{tpu_custom_call.1} parent=1 // pred_region
      _
    $region41: #{tpu_custom_call.1} parent=1 // pred_fallthru
      _
    // Predicated region
    $region42: #{tpu_custom_call.1} parent=1 // pred_check
      _
    $region43: #{tpu_custom_call.1} parent=1 // pred_check_branch
      %113 = sbr.rel (0) target = $region45
    $region44: #{tpu_custom_call.1} parent=1 // pred_region
      _
    $region45: #{tpu_custom_call.1} parent=1 // pred_fallthru
      _
    // Predicated region
    $region46: #{tpu_custom_call.1} parent=1 // pred_check
      _
    $region47: #{tpu_custom_call.1} parent=1 // pred_check_branch
      %115 = sbr.rel (0) target = $region49
    $region48: #{tpu_custom_call.1} parent=1 // pred_region
      _
    $region49: #{tpu_custom_call.1} parent=1 // pred_fallthru
      _
    // Predicated region
    $region50: #{tpu_custom_call.1} parent=1 // pred_check
      _
    $region51: #{tpu_custom_call.1} parent=1 // pred_check_branch
      %117 = sbr.rel (0) target = $region53
    $region52: #{tpu_custom_call.1} parent=1 // pred_region
      %118 = dma.done [#allocation3], 256
    $region53: #{tpu_custom_call.1} parent=1 // pred_fallthru
      _
    // Predicated region
    $region54: #{tpu_custom_call.1} parent=1 // pred_check
      _
    $region55: #{tpu_custom_call.1} parent=1 // pred_check_branch
      %120 = sbr.rel (0) target = $region57
    $region56: #{tpu_custom_call.1} parent=1 // pred_region
      %121 = dma.done [#allocation6], 256
    $region57: #{tpu_custom_call.1} parent=1 // pred_fallthru
      _
    // Predicated region
    $region58: #{tpu_custom_call.1} parent=1 // pred_check
      _
    $region59: #{tpu_custom_call.1} parent=1 // pred_check_branch
      %123 = sbr.rel (0) target = $region61
    $region60: #{tpu_custom_call.1} parent=1 // pred_region
      %124 = dma.done [#allocation6], 256
    $region61: #{tpu_custom_call.1} parent=1 // pred_fallthru
      _
    // Predicated region
    $region62: #{tpu_custom_call.1} parent=1 // pred_check
      _
    $region63: #{tpu_custom_call.1} parent=1 // pred_check_branch
      %126 = sbr.rel (0) target = $region65
    $region64: #{tpu_custom_call.1} parent=1 // pred_region
      %127 = dma.done [#allocation9], 2048
    $region65: #{tpu_custom_call.1} parent=1 // pred_fallthru
      _
    // Predicated region
    $region66: #{tpu_custom_call.1} parent=1 // pred_check
      _
    $region67: #{tpu_custom_call.1} parent=1 // pred_check_branch
      %129 = sbr.rel (0) target = $region69
    $region68: #{tpu_custom_call.1} parent=1 // pred_region
      %130 = dma.done [#allocation9], 2048
    $region69: #{tpu_custom_call.1} parent=1 // pred_fallthru
      _
    // Predicated region
    $region70: #{tpu_custom_call.1} parent=1 // pred_check
      _
    $region71: #{tpu_custom_call.1} parent=1 // pred_check_branch
      %132 = sbr.rel (0) target = $region73
    $region72: #{tpu_custom_call.1} parent=1 // pred_region
      %133 = dma.done [#allocation12], 2048
    $region73: #{tpu_custom_call.1} parent=1 // pred_fallthru
      _
    // Predicated region
    $region74: #{tpu_custom_call.1} parent=1 // pred_check
      _
    $region75: #{tpu_custom_call.1} parent=1 // pred_check_branch
      %135 = sbr.rel (0) target = $region77
    $region76: #{tpu_custom_call.1} parent=1 // pred_region
      %136 = dma.done [#allocation12], 2048
    $region77: #{tpu_custom_call.1} parent=1 // pred_fallthru
      _
    %v137 = vld [vmem:[#allocation2] sm:$0xff]
    %v138 = vld [vmem:[#allocation2 + $0x8] sm:$0xff]
    %v139 = vld [vmem:[#allocation5] sm:$0xff]
    %v140 = vld [vmem:[#allocation5 + $0x8] sm:$0xff]
    %v141 = vld [vmem:[#allocation7] sm:$0xff]
    %v142 = vld [vmem:[#allocation7 + $0x8] sm:$0xff]
    %v143 = vld [vmem:[#allocation8] sm:$0xff]
    %v144 = vld [vmem:[#allocation8 + $0x8] sm:$0xff]
    %v145 = vld [vmem:[#allocation8 + $0x10] sm:$0xff]
    %v146 = vld [vmem:[#allocation8 + $0x18] sm:$0xff]
    %v147 = vld [vmem:[#allocation8 + $0x20] sm:$0xff]
    %v148 = vld [vmem:[#allocation8 + $0x28] sm:$0xff]
    %v149 = vld [vmem:[#allocation8 + $0x30] sm:$0xff]
    %v150 = vld [vmem:[#allocation8 + $0x38] sm:$0xff]
    %v151 = vld [vmem:[#allocation8 + $0x40] sm:$0xff]
    %v152 = vld [vmem:[#allocation8 + $0x48] sm:$0xff]
    %v153 = vld [vmem:[#allocation8 + $0x50] sm:$0xff]
    %v154 = vld [vmem:[#allocation8 + $0x58] sm:$0xff]
    %v155 = vld [vmem:[#allocation8 + $0x60] sm:$0xff]
    %v156 = vld [vmem:[#allocation8 + $0x68] sm:$0xff]
    %v157 = vld [vmem:[#allocation8 + $0x70] sm:$0xff]
    %v158 = vld [vmem:[#allocation8 + $0x78] sm:$0xff]
    %159 = vmatprep.subr.mxu0 0.0
    %160 = vmatpush1.msra.mxu0 %v143
    %161 = vmatprep.subr.mxu0 0.0
    %162 = vmatpush1.msra.mxu0 %v144
    %163 = vmatprep.subr.mxu0 0.0
    %164 = vmatpush1.msra.mxu0 %v145
    %165 = vmatprep.subr.mxu0 0.0
    %166 = vmatpush1.msra.mxu0 %v146
    %167 = vmatprep.subr.mxu0 0.0
    %168 = vmatpush1.msra.mxu0 %v147
    %169 = vmatprep.subr.mxu0 0.0
    %170 = vmatpush1.msra.mxu0 %v148
    %171 = vmatprep.subr.mxu0 0.0
    %172 = vmatpush1.msra.mxu0 %v149
    %173 = vmatprep.subr.mxu0 0.0
    %174 = vmatpush1.msra.mxu0 %v150
    %175 = vmatprep.subr.mxu0 0.0
    %176 = vmatpush1.msra.mxu0 %v151
    %177 = vmatprep.subr.mxu0 0.0
    %178 = vmatpush1.msra.mxu0 %v152
    %179 = vmatprep.subr.mxu0 0.0
    %180 = vmatpush1.msra.mxu0 %v153
    %181 = vmatprep.subr.mxu0 0.0
    %182 = vmatpush1.msra.mxu0 %v154
    %183 = vmatprep.subr.mxu0 0.0
    %184 = vmatpush1.msra.mxu0 %v155
    %185 = vmatprep.subr.mxu0 0.0
    %186 = vmatpush1.msra.mxu0 %v156
    %187 = vmatprep.subr.mxu0 0.0
    %188 = vmatpush1.msra.mxu0 %v157
    %189 = vmatprep.subr.mxu0 0.0
    %190 = vmatpush1.msra.mxu0 %v158
    %191 = vmatprep.subr.mxu0 0.0
    %192 = vmatpush1.msra.mxu0 0.0
    %193 = vmatprep.subr.mxu0 0.0
    %194 = vmatpush1.msra.mxu0 0.0
    %195 = vmatprep.subr.mxu0 0.0
    %196 = vmatpush1.msra.mxu0 0.0
    %197 = vmatprep.subr.mxu0 0.0
    %198 = vmatpush1.msra.mxu0 0.0
    %199 = vmatprep.subr.mxu0 0.0
    %200 = vmatpush1.msra.mxu0 0.0
    %201 = vmatprep.subr.mxu0 0.0
    %202 = vmatpush1.msra.mxu0 0.0
    %203 = vmatprep.subr.mxu0 0.0
    %204 = vmatpush1.msra.mxu0 0.0
    %205 = vmatprep.subr.mxu0 0.0
    %206 = vmatpush1.msra.mxu0 0.0
    %207 = vmatprep.subr.mxu0 0.0
    %208 = vmatpush1.msra.mxu0 0.0
    %209 = vmatprep.subr.mxu0 0.0
    %210 = vmatpush1.msra.mxu0 0.0
    %211 = vmatprep.subr.mxu0 0.0
    %212 = vmatpush1.msra.mxu0 0.0
    %213 = vmatprep.subr.mxu0 0.0
    %214 = vmatpush1.msra.mxu0 0.0
    %215 = vmatprep.subr.mxu0 0.0
    %216 = vmatpush1.msra.mxu0 0.0
    %217 = vmatprep.subr.mxu0 0.0
    %218 = vmatpush1.msra.mxu0 0.0
    %219 = vmatprep.subr.mxu0 0.0
    %220 = vmatpush1.msra.mxu0 0.0
    %221 = vmatprep.subr.mxu0 0.0
    %222 = vmatpush1.msra.mxu0 0.0
    %223 = vmatprep.mubr.f32.mxu0 0.0
    %224 = vmatmul.mubr.f32.gmra.mrb[0].mxu0 %v137
    %v225 = vpop.f32.mrb[0].mxu0
    %v226 = vadd.f32 0.0, %v225
    %v227 = vpop.f32.mrb[0].mxu0
    %228 = vmatprep.mubr.f32.mxu0 0.0
    %229 = vmatmul.mubr.f32.gmra.mrb[0].mxu0 %v138
    %v230 = vpop.f32.mrb[0].mxu0
    %v231 = vadd.f32 0.0, %v230
    %v232 = vpop.f32.mrb[0].mxu0
    %233 = vdwg.mxu0
    %v234 = vld [vmem:[#allocation10] sm:$0xff]
    %v235 = vld [vmem:[#allocation10 + $0x8] sm:$0xff]
    %v236 = vld [vmem:[#allocation10 + $0x10] sm:$0xff]
    %v237 = vld [vmem:[#allocation10 + $0x18] sm:$0xff]
    %v238 = vld [vmem:[#allocation10 + $0x20] sm:$0xff]
    %v239 = vld [vmem:[#allocation10 + $0x28] sm:$0xff]
    %v240 = vld [vmem:[#allocation10 + $0x30] sm:$0xff]
    %v241 = vld [vmem:[#allocation10 + $0x38] sm:$0xff]
    %v242 = vld [vmem:[#allocation10 + $0x40] sm:$0xff]
    %v243 = vld [vmem:[#allocation10 + $0x48] sm:$0xff]
    %v244 = vld [vmem:[#allocation10 + $0x50] sm:$0xff]
    %v245 = vld [vmem:[#allocation10 + $0x58] sm:$0xff]
    %v246 = vld [vmem:[#allocation10 + $0x60] sm:$0xff]
    %v247 = vld [vmem:[#allocation10 + $0x68] sm:$0xff]
    %v248 = vld [vmem:[#allocation10 + $0x70] sm:$0xff]
    %v249 = vld [vmem:[#allocation10 + $0x78] sm:$0xff]
    %v250 = vld [vmem:[%s5] sm:$0x1]
    %v252 = vlaneseq
    %v253 = vshrl.u32 %v252, 7
    %v254 = vsub.s32 0, %v253
    %v255 = vrot.slane %v250, %v254
    %257 = vmatprep.subr.mxu0 0.0
    %258 = vmatpush1.msra.mxu0 %v234
    %259 = vmatprep.subr.mxu0 0.0
    %260 = vmatpush1.msra.mxu0 %v235
    %261 = vmatprep.subr.mxu0 0.0
    %262 = vmatpush1.msra.mxu0 %v236
    %263 = vmatprep.subr.mxu0 0.0
    %264 = vmatpush1.msra.mxu0 %v237
    %265 = vmatprep.subr.mxu0 0.0
    %266 = vmatpush1.msra.mxu0 %v238
    %267 = vmatprep.subr.mxu0 0.0
    %268 = vmatpush1.msra.mxu0 %v239
    %269 = vmatprep.subr.mxu0 0.0
    %270 = vmatpush1.msra.mxu0 %v240
    %271 = vmatprep.subr.mxu0 0.0
    %272 = vmatpush1.msra.mxu0 %v241
    %273 = vmatprep.subr.mxu0 0.0
    %274 = vmatpush1.msra.mxu0 %v242
    %275 = vmatprep.subr.mxu0 0.0
    %276 = vmatpush1.msra.mxu0 %v243
    %277 = vmatprep.subr.mxu0 0.0
    %278 = vmatpush1.msra.mxu0 %v244
    %279 = vmatprep.subr.mxu0 0.0
    %280 = vmatpush1.msra.mxu0 %v245
    %281 = vmatprep.subr.mxu0 0.0
    %282 = vmatpush1.msra.mxu0 %v246
    %283 = vmatprep.subr.mxu0 0.0
    %284 = vmatpush1.msra.mxu0 %v247
    %285 = vmatprep.subr.mxu0 0.0
    %286 = vmatpush1.msra.mxu0 %v248
    %287 = vmatprep.subr.mxu0 0.0
    %288 = vmatpush1.msra.mxu0 %v249
    %289 = vmatprep.subr.mxu0 0.0
    %290 = vmatpush1.msra.mxu0 0.0
    %291 = vmatprep.subr.mxu0 0.0
    %292 = vmatpush1.msra.mxu0 0.0
    %293 = vmatprep.subr.mxu0 0.0
    %294 = vmatpush1.msra.mxu0 0.0
    %295 = vmatprep.subr.mxu0 0.0
    %296 = vmatpush1.msra.mxu0 0.0
    %297 = vmatprep.subr.mxu0 0.0
    %298 = vmatpush1.msra.mxu0 0.0
    %299 = vmatprep.subr.mxu0 0.0
    %300 = vmatpush1.msra.mxu0 0.0
    %301 = vmatprep.subr.mxu0 0.0
    %302 = vmatpush1.msra.mxu0 0.0
    %303 = vmatprep.subr.mxu0 0.0
    %304 = vmatpush1.msra.mxu0 0.0
    %305 = vmatprep.subr.mxu0 0.0
    %306 = vmatpush1.msra.mxu0 0.0
    %307 = vmatprep.subr.mxu0 0.0
    %308 = vmatpush1.msra.mxu0 0.0
    %309 = vmatprep.subr.mxu0 0.0
    %310 = vmatpush1.msra.mxu0 0.0
    %311 = vmatprep.subr.mxu0 0.0
    %312 = vmatpush1.msra.mxu0 0.0
    %313 = vmatprep.subr.mxu0 0.0
    %314 = vmatpush1.msra.mxu0 0.0
    %315 = vmatprep.subr.mxu0 0.0
    %316 = vmatpush1.msra.mxu0 0.0
    %317 = vmatprep.subr.mxu0 0.0
    %318 = vmatpush1.msra.mxu0 0.0
    %319 = vmatprep.subr.mxu0 0.0
    %320 = vmatpush1.msra.mxu0 0.0
    %321 = vmatprep.mubr.f32.mxu0 0.0
    %322 = vmatmul.mubr.f32.gmra.mrb[0].mxu0 %v139
    %v323 = vpop.f32.mrb[0].mxu0
    %v324 = vadd.f32 %v255, %v323
    %v325 = vpop.f32.mrb[0].mxu0
    %326 = vmatprep.mubr.f32.mxu0 0.0
    %327 = vmatmul.mubr.f32.gmra.mrb[0].mxu0 %v140
    %v328 = vpop.f32.mrb[0].mxu0
    %v329 = vadd.f32 %v255, %v328
    %v330 = vpop.f32.mrb[0].mxu0
    %331 = vdwg.mxu0
    %v332 = vld [vmem:[#allocation11] sm:$0xff]
    %v333 = vld [vmem:[#allocation11 + $0x8] sm:$0xff]
    %v334 = vld [vmem:[#allocation11 + $0x10] sm:$0xff]
    %v335 = vld [vmem:[#allocation11 + $0x18] sm:$0xff]
    %v336 = vld [vmem:[#allocation11 + $0x20] sm:$0xff]
    %v337 = vld [vmem:[#allocation11 + $0x28] sm:$0xff]
    %v338 = vld [vmem:[#allocation11 + $0x30] sm:$0xff]
    %v339 = vld [vmem:[#allocation11 + $0x38] sm:$0xff]
    %v340 = vld [vmem:[#allocation11 + $0x40] sm:$0xff]
    %v341 = vld [vmem:[#allocation11 + $0x48] sm:$0xff]
    %v342 = vld [vmem:[#allocation11 + $0x50] sm:$0xff]
    %v343 = vld [vmem:[#allocation11 + $0x58] sm:$0xff]
    %v344 = vld [vmem:[#allocation11 + $0x60] sm:$0xff]
    %v345 = vld [vmem:[#allocation11 + $0x68] sm:$0xff]
    %v346 = vld [vmem:[#allocation11 + $0x70] sm:$0xff]
    %v347 = vld [vmem:[#allocation11 + $0x78] sm:$0xff]
    %v348 = vld [vmem:[%s7] sm:$0x1]
    %v350 = vlaneseq
    %v351 = vshrl.u32 %v350, 7
    %v352 = vsub.s32 0, %v351
    %v353 = vrot.slane %v348, %v352
    %355 = vmatprep.subr.mxu0 0.0
    %356 = vmatpush1.msra.mxu0 %v332
    %357 = vmatprep.subr.mxu0 0.0
    %358 = vmatpush1.msra.mxu0 %v333
    %359 = vmatprep.subr.mxu0 0.0
    %360 = vmatpush1.msra.mxu0 %v334
    %361 = vmatprep.subr.mxu0 0.0
    %362 = vmatpush1.msra.mxu0 %v335
    %363 = vmatprep.subr.mxu0 0.0
    %364 = vmatpush1.msra.mxu0 %v336
    %365 = vmatprep.subr.mxu0 0.0
    %366 = vmatpush1.msra.mxu0 %v337
    %367 = vmatprep.subr.mxu0 0.0
    %368 = vmatpush1.msra.mxu0 %v338
    %369 = vmatprep.subr.mxu0 0.0
    %370 = vmatpush1.msra.mxu0 %v339
    %371 = vmatprep.subr.mxu0 0.0
    %372 = vmatpush1.msra.mxu0 %v340
    %373 = vmatprep.subr.mxu0 0.0
    %374 = vmatpush1.msra.mxu0 %v341
    %375 = vmatprep.subr.mxu0 0.0
    %376 = vmatpush1.msra.mxu0 %v342
    %377 = vmatprep.subr.mxu0 0.0
    %378 = vmatpush1.msra.mxu0 %v343
    %379 = vmatprep.subr.mxu0 0.0
    %380 = vmatpush1.msra.mxu0 %v344
    %381 = vmatprep.subr.mxu0 0.0
    %382 = vmatpush1.msra.mxu0 %v345
    %383 = vmatprep.subr.mxu0 0.0
    %384 = vmatpush1.msra.mxu0 %v346
    %385 = vmatprep.subr.mxu0 0.0
    %386 = vmatpush1.msra.mxu0 %v347
    %387 = vmatprep.subr.mxu0 0.0
    %388 = vmatpush1.msra.mxu0 0.0
    %389 = vmatprep.subr.mxu0 0.0
    %390 = vmatpush1.msra.mxu0 0.0
    %391 = vmatprep.subr.mxu0 0.0
    %392 = vmatpush1.msra.mxu0 0.0
    %393 = vmatprep.subr.mxu0 0.0
    %394 = vmatpush1.msra.mxu0 0.0
    %395 = vmatprep.subr.mxu0 0.0
    %396 = vmatpush1.msra.mxu0 0.0
    %397 = vmatprep.subr.mxu0 0.0
    %398 = vmatpush1.msra.mxu0 0.0
    %399 = vmatprep.subr.mxu0 0.0
    %400 = vmatpush1.msra.mxu0 0.0
    %401 = vmatprep.subr.mxu0 0.0
    %402 = vmatpush1.msra.mxu0 0.0
    %403 = vmatprep.subr.mxu0 0.0
    %404 = vmatpush1.msra.mxu0 0.0
    %405 = vmatprep.subr.mxu0 0.0
    %406 = vmatpush1.msra.mxu0 0.0
    %407 = vmatprep.subr.mxu0 0.0
    %408 = vmatpush1.msra.mxu0 0.0
    %409 = vmatprep.subr.mxu0 0.0
    %410 = vmatpush1.msra.mxu0 0.0
    %411 = vmatprep.subr.mxu0 0.0
    %412 = vmatpush1.msra.mxu0 0.0
    %413 = vmatprep.subr.mxu0 0.0
    %414 = vmatpush1.msra.mxu0 0.0
    %415 = vmatprep.subr.mxu0 0.0
    %416 = vmatpush1.msra.mxu0 0.0
    %417 = vmatprep.subr.mxu0 0.0
    %418 = vmatpush1.msra.mxu0 0.0
    %419 = vmatprep.mubr.f32.mxu0 0.0
    %420 = vmatmul.mubr.f32.gmra.mrb[0].mxu0 %v141
    %v421 = vpop.f32.mrb[0].mxu0
    %v422 = vadd.f32 %v353, %v421
    %v423 = vpop.f32.mrb[0].mxu0
    %424 = vmatprep.mubr.f32.mxu0 0.0
    %425 = vmatmul.mubr.f32.gmra.mrb[0].mxu0 %v142
    %v426 = vpop.f32.mrb[0].mxu0
    %v427 = vadd.f32 %v353, %v426
    %v428 = vpop.f32.mrb[0].mxu0
    %429 = vdwg.mxu0
    %430 = vmatprep.subr.mxu0 0.0
    %431 = vmatpush1.xpose.msra.mxu0 %v324
    %432 = vmatprep.subr.mxu0 0.0
    %433 = vmatpush1.xpose.msra.mxu0 0.0
    %434 = vmatprep.subr.mxu0 0.0
    %435 = vmatpush1.xpose.msra.mxu0 0.0
    %436 = vmatprep.subr.mxu0 0.0
    %437 = vmatpush1.xpose.msra.mxu0 0.0
    %438 = vmatprep.subr.mxu0 0.0
    %439 = vmatpush1.xpose.msra.mxu0 0.0
    %440 = vmatprep.subr.mxu0 0.0
    %441 = vmatpush1.xpose.msra.mxu0 0.0
    %442 = vmatprep.subr.mxu0 0.0
    %443 = vmatpush1.xpose.msra.mxu0 0.0
    %444 = vmatprep.subr.mxu0 0.0
    %445 = vmatpush1.xpose.msra.mxu0 0.0
    %446 = vmatprep.subr.mxu0 0.0
    %447 = vmatpush1.xpose.msra.mxu0 0.0
    %448 = vmatprep.subr.mxu0 0.0
    %449 = vmatpush1.xpose.msra.mxu0 0.0
    %450 = vmatprep.subr.mxu0 0.0
    %451 = vmatpush1.xpose.msra.mxu0 0.0
    %452 = vmatprep.subr.mxu0 0.0
    %453 = vmatpush1.xpose.msra.mxu0 0.0
    %454 = vmatprep.subr.mxu0 0.0
    %455 = vmatpush1.xpose.msra.mxu0 0.0
    %456 = vmatprep.subr.mxu0 0.0
    %457 = vmatpush1.xpose.msra.mxu0 0.0
    %458 = vmatprep.subr.mxu0 0.0
    %459 = vmatpush1.xpose.msra.mxu0 0.0
    %460 = vmatprep.subr.mxu0 0.0
    %461 = vmatpush1.xpose.msra.mxu0 0.0
    %462 = vmatprep.subr.mxu0 0.0
    %463 = vmatpush1.xpose.msra.mxu0 0.0
    %464 = vmatprep.subr.mxu0 0.0
    %465 = vmatpush1.xpose.msra.mxu0 0.0
    %466 = vmatprep.subr.mxu0 0.0
    %467 = vmatpush1.xpose.msra.mxu0 0.0
    %468 = vmatprep.subr.mxu0 0.0
    %469 = vmatpush1.xpose.msra.mxu0 0.0
    %470 = vmatprep.subr.mxu0 0.0
    %471 = vmatpush1.xpose.msra.mxu0 0.0
    %472 = vmatprep.subr.mxu0 0.0
    %473 = vmatpush1.xpose.msra.mxu0 0.0
    %474 = vmatprep.subr.mxu0 0.0
    %475 = vmatpush1.xpose.msra.mxu0 0.0
    %476 = vmatprep.subr.mxu0 0.0
    %477 = vmatpush1.xpose.msra.mxu0 0.0
    %478 = vmatprep.subr.mxu0 0.0
    %479 = vmatpush1.xpose.msra.mxu0 0.0
    %480 = vmatprep.subr.mxu0 0.0
    %481 = vmatpush1.xpose.msra.mxu0 0.0
    %482 = vmatprep.subr.mxu0 0.0
    %483 = vmatpush1.xpose.msra.mxu0 0.0
    %484 = vmatprep.subr.mxu0 0.0
    %485 = vmatpush1.xpose.msra.mxu0 0.0
    %486 = vmatprep.subr.mxu0 0.0
    %487 = vmatpush1.xpose.msra.mxu0 0.0
    %488 = vmatprep.subr.mxu0 0.0
    %489 = vmatpush1.xpose.msra.mxu0 0.0
    %490 = vmatprep.subr.mxu0 0.0
    %491 = vmatpush1.xpose.msra.mxu0 0.0
    %492 = vmatprep.subr.mxu0 0.0
    %493 = vmatpush1.xpose.msra.mxu0 0.0
    %494 = vmatprep.mubr.f32.mxu0 0.0
    %495 = vmatmul.mubr.f32.gmra.mrb[0].mxu0 %v226
    %v496 = vpop.f32.mrb[0].mxu0
    %v497 = vadd.f32 0.0, %v496
    %v498 = vpop.f32.mrb[0].mxu0
    %499 = vdwg.mxu0
    %500 = vmatprep.subr.mxu0 0.0
    %501 = vmatpush1.xpose.msra.mxu0 %v329
    %502 = vmatprep.subr.mxu0 0.0
    %503 = vmatpush1.xpose.msra.mxu0 0.0
    %504 = vmatprep.subr.mxu0 0.0
    %505 = vmatpush1.xpose.msra.mxu0 0.0
    %506 = vmatprep.subr.mxu0 0.0
    %507 = vmatpush1.xpose.msra.mxu0 0.0
    %508 = vmatprep.subr.mxu0 0.0
    %509 = vmatpush1.xpose.msra.mxu0 0.0
    %510 = vmatprep.subr.mxu0 0.0
    %511 = vmatpush1.xpose.msra.mxu0 0.0
    %512 = vmatprep.subr.mxu0 0.0
    %513 = vmatpush1.xpose.msra.mxu0 0.0
    %514 = vmatprep.subr.mxu0 0.0
    %515 = vmatpush1.xpose.msra.mxu0 0.0
    %516 = vmatprep.subr.mxu0 0.0
    %517 = vmatpush1.xpose.msra.mxu0 0.0
    %518 = vmatprep.subr.mxu0 0.0
    %519 = vmatpush1.xpose.msra.mxu0 0.0
    %520 = vmatprep.subr.mxu0 0.0
    %521 = vmatpush1.xpose.msra.mxu0 0.0
    %522 = vmatprep.subr.mxu0 0.0
    %523 = vmatpush1.xpose.msra.mxu0 0.0
    %524 = vmatprep.subr.mxu0 0.0
    %525 = vmatpush1.xpose.msra.mxu0 0.0
    %526 = vmatprep.subr.mxu0 0.0
    %527 = vmatpush1.xpose.msra.mxu0 0.0
    %528 = vmatprep.subr.mxu0 0.0
    %529 = vmatpush1.xpose.msra.mxu0 0.0
    %530 = vmatprep.subr.mxu0 0.0
    %531 = vmatpush1.xpose.msra.mxu0 0.0
    %532 = vmatprep.subr.mxu0 0.0
    %533 = vmatpush1.xpose.msra.mxu0 0.0
    %534 = vmatprep.subr.mxu0 0.0
    %535 = vmatpush1.xpose.msra.mxu0 0.0
    %536 = vmatprep.subr.mxu0 0.0
    %537 = vmatpush1.xpose.msra.mxu0 0.0
    %538 = vmatprep.subr.mxu0 0.0
    %539 = vmatpush1.xpose.msra.mxu0 0.0
    %540 = vmatprep.subr.mxu0 0.0
    %541 = vmatpush1.xpose.msra.mxu0 0.0
    %542 = vmatprep.subr.mxu0 0.0
    %543 = vmatpush1.xpose.msra.mxu0 0.0
    %544 = vmatprep.subr.mxu0 0.0
    %545 = vmatpush1.xpose.msra.mxu0 0.0
    %546 = vmatprep.subr.mxu0 0.0
    %547 = vmatpush1.xpose.msra.mxu0 0.0
    %548 = vmatprep.subr.mxu0 0.0
    %549 = vmatpush1.xpose.msra.mxu0 0.0
    %550 = vmatprep.subr.mxu0 0.0
    %551 = vmatpush1.xpose.msra.mxu0 0.0
    %552 = vmatprep.subr.mxu0 0.0
    %553 = vmatpush1.xpose.msra.mxu0 0.0
    %554 = vmatprep.subr.mxu0 0.0
    %555 = vmatpush1.xpose.msra.mxu0 0.0
    %556 = vmatprep.subr.mxu0 0.0
    %557 = vmatpush1.xpose.msra.mxu0 0.0
    %558 = vmatprep.subr.mxu0 0.0
    %559 = vmatpush1.xpose.msra.mxu0 0.0
    %560 = vmatprep.subr.mxu0 0.0
    %561 = vmatpush1.xpose.msra.mxu0 0.0
    %562 = vmatprep.subr.mxu0 0.0
    %563 = vmatpush1.xpose.msra.mxu0 0.0
    %564 = vmatprep.mubr.f32.mxu0 0.0
    %565 = vmatmul.mubr.f32.gmra.mrb[0].mxu0 %v231
    %v566 = vpop.f32.mrb[0].mxu0
    %v567 = vadd.f32 0.0, %v566
    %v568 = vpop.f32.mrb[0].mxu0
    %569 = vdwg.mxu0
    %vm570 = vcmask 64512
    %v571 = vsel %vm570, %v497, -inf
    %572 = vmax.xlane.f32.xlu0 %v571
    %v573 = vpop.xlane.xlu0 %572
    %v574 = vsel %vm570, %v567, -inf
    %575 = vmax.xlane.f32.xlu0 %v574
    %v576 = vpop.xlane.xlu0 %575
    %v577 = vsub.f32 %v497, %v573
    %v578 = vsub.f32 %v567, %v576
    %v579 = vmul.f32 %v577, 1.442695
    %v580 = vpow.pop %v579
    %v581 = vmul.f32 %v578, 1.442695
    %v582 = vpow.pop %v581
    %v583 = vsel %vm570, %v580, 0.0
    %584 = vadd.xlane.f32.xlu0 %v583
    %v585 = vpop.xlane.xlu0 %584
    %v586 = vsel %vm570, %v582, 0.0
    %587 = vadd.xlane.f32.xlu0 %v586
    %v588 = vpop.xlane.xlu0 %587
    %v589 = vrcp.pop %v585
    %v590 = vrcp.pop %v588
    %v591 = vmul.f32 %v580, %v589
    %v592 = vmul.f32 %v582, %v590
    %v594 = vsel %vm570, %v591, 0
    %596 = vmatprep.subr.mxu0 0.0
    %597 = vmatpush1.msra.mxu0 %v422
    %598 = vmatprep.subr.mxu0 0.0
    %599 = vmatpush1.msra.mxu0 0.0
    %600 = vmatprep.subr.mxu0 0.0
    %601 = vmatpush1.msra.mxu0 0.0
    %602 = vmatprep.subr.mxu0 0.0
    %603 = vmatpush1.msra.mxu0 0.0
    %604 = vmatprep.subr.mxu0 0.0
    %605 = vmatpush1.msra.mxu0 0.0
    %606 = vmatprep.subr.mxu0 0.0
    %607 = vmatpush1.msra.mxu0 0.0
    %608 = vmatprep.subr.mxu0 0.0
    %609 = vmatpush1.msra.mxu0 0.0
    %610 = vmatprep.subr.mxu0 0.0
    %611 = vmatpush1.msra.mxu0 0.0
    %612 = vmatprep.subr.mxu0 0.0
    %613 = vmatpush1.msra.mxu0 0.0
    %614 = vmatprep.subr.mxu0 0.0
    %615 = vmatpush1.msra.mxu0 0.0
    %616 = vmatprep.subr.mxu0 0.0
    %617 = vmatpush1.msra.mxu0 0.0
    %618 = vmatprep.subr.mxu0 0.0
    %619 = vmatpush1.msra.mxu0 0.0
    %620 = vmatprep.subr.mxu0 0.0
    %621 = vmatpush1.msra.mxu0 0.0
    %622 = vmatprep.subr.mxu0 0.0
    %623 = vmatpush1.msra.mxu0 0.0
    %624 = vmatprep.subr.mxu0 0.0
    %625 = vmatpush1.msra.mxu0 0.0
    %626 = vmatprep.subr.mxu0 0.0
    %627 = vmatpush1.msra.mxu0 0.0
    %628 = vmatprep.subr.mxu0 0.0
    %629 = vmatpush1.msra.mxu0 0.0
    %630 = vmatprep.subr.mxu0 0.0
    %631 = vmatpush1.msra.mxu0 0.0
    %632 = vmatprep.subr.mxu0 0.0
    %633 = vmatpush1.msra.mxu0 0.0
    %634 = vmatprep.subr.mxu0 0.0
    %635 = vmatpush1.msra.mxu0 0.0
    %636 = vmatprep.subr.mxu0 0.0
    %637 = vmatpush1.msra.mxu0 0.0
    %638 = vmatprep.subr.mxu0 0.0
    %639 = vmatpush1.msra.mxu0 0.0
    %640 = vmatprep.subr.mxu0 0.0
    %641 = vmatpush1.msra.mxu0 0.0
    %642 = vmatprep.subr.mxu0 0.0
    %643 = vmatpush1.msra.mxu0 0.0
    %644 = vmatprep.subr.mxu0 0.0
    %645 = vmatpush1.msra.mxu0 0.0
    %646 = vmatprep.subr.mxu0 0.0
    %647 = vmatpush1.msra.mxu0 0.0
    %648 = vmatprep.subr.mxu0 0.0
    %649 = vmatpush1.msra.mxu0 0.0
    %650 = vmatprep.subr.mxu0 0.0
    %651 = vmatpush1.msra.mxu0 0.0
    %652 = vmatprep.subr.mxu0 0.0
    %653 = vmatpush1.msra.mxu0 0.0
    %654 = vmatprep.subr.mxu0 0.0
    %655 = vmatpush1.msra.mxu0 0.0
    %656 = vmatprep.subr.mxu0 0.0
    %657 = vmatpush1.msra.mxu0 0.0
    %658 = vmatprep.subr.mxu0 0.0
    %659 = vmatpush1.msra.mxu0 0.0
    %660 = vmatprep.mubr.f32.mxu0 0.0
    %661 = vmatmul.mubr.f32.gmra.mrb[0].mxu0 %v594
    %v662 = vpop.f32.mrb[0].mxu0
    %v663 = vadd.f32 0.0, %v662
    %v664 = vpop.f32.mrb[0].mxu0
    %665 = vdwg.mxu0
    %v667 = vsel %vm570, %v592, 0
    %669 = vmatprep.subr.mxu0 0.0
    %670 = vmatpush1.msra.mxu0 %v427
    %671 = vmatprep.subr.mxu0 0.0
    %672 = vmatpush1.msra.mxu0 0.0
    %673 = vmatprep.subr.mxu0 0.0
    %674 = vmatpush1.msra.mxu0 0.0
    %675 = vmatprep.subr.mxu0 0.0
    %676 = vmatpush1.msra.mxu0 0.0
    %677 = vmatprep.subr.mxu0 0.0
    %678 = vmatpush1.msra.mxu0 0.0
    %679 = vmatprep.subr.mxu0 0.0
    %680 = vmatpush1.msra.mxu0 0.0
    %681 = vmatprep.subr.mxu0 0.0
    %682 = vmatpush1.msra.mxu0 0.0
    %683 = vmatprep.subr.mxu0 0.0
    %684 = vmatpush1.msra.mxu0 0.0
    %685 = vmatprep.subr.mxu0 0.0
    %686 = vmatpush1.msra.mxu0 0.0
    %687 = vmatprep.subr.mxu0 0.0
    %688 = vmatpush1.msra.mxu0 0.0
    %689 = vmatprep.subr.mxu0 0.0
    %690 = vmatpush1.msra.mxu0 0.0
    %691 = vmatprep.subr.mxu0 0.0
    %692 = vmatpush1.msra.mxu0 0.0
    %693 = vmatprep.subr.mxu0 0.0
    %694 = vmatpush1.msra.mxu0 0.0
    %695 = vmatprep.subr.mxu0 0.0
    %696 = vmatpush1.msra.mxu0 0.0
    %697 = vmatprep.subr.mxu0 0.0
    %698 = vmatpush1.msra.mxu0 0.0
    %699 = vmatprep.subr.mxu0 0.0
    %700 = vmatpush1.msra.mxu0 0.0
    %701 = vmatprep.subr.mxu0 0.0
    %702 = vmatpush1.msra.mxu0 0.0
    %703 = vmatprep.subr.mxu0 0.0
    %704 = vmatpush1.msra.mxu0 0.0
    %705 = vmatprep.subr.mxu0 0.0
    %706 = vmatpush1.msra.mxu0 0.0
    %707 = vmatprep.subr.mxu0 0.0
    %708 = vmatpush1.msra.mxu0 0.0
    %709 = vmatprep.subr.mxu0 0.0
    %710 = vmatpush1.msra.mxu0 0.0
    %711 = vmatprep.subr.mxu0 0.0
    %712 = vmatpush1.msra.mxu0 0.0
    %713 = vmatprep.subr.mxu0 0.0
    %714 = vmatpush1.msra.mxu0 0.0
    %715 = vmatprep.subr.mxu0 0.0
    %716 = vmatpush1.msra.mxu0 0.0
    %717 = vmatprep.subr.mxu0 0.0
    %718 = vmatpush1.msra.mxu0 0.0
    %719 = vmatprep.subr.mxu0 0.0
    %720 = vmatpush1.msra.mxu0 0.0
    %721 = vmatprep.subr.mxu0 0.0
    %722 = vmatpush1.msra.mxu0 0.0
    %723 = vmatprep.subr.mxu0 0.0
    %724 = vmatpush1.msra.mxu0 0.0
    %725 = vmatprep.subr.mxu0 0.0
    %726 = vmatpush1.msra.mxu0 0.0
    %727 = vmatprep.subr.mxu0 0.0
    %728 = vmatpush1.msra.mxu0 0.0
    %729 = vmatprep.subr.mxu0 0.0
    %730 = vmatpush1.msra.mxu0 0.0
    %731 = vmatprep.subr.mxu0 0.0
    %732 = vmatpush1.msra.mxu0 0.0
    %733 = vmatprep.mubr.f32.mxu0 0.0
    %734 = vmatmul.mubr.f32.gmra.mrb[0].mxu0 %v667
    %v735 = vpop.f32.mrb[0].mxu0
    %v736 = vadd.f32 0.0, %v735
    %v737 = vpop.f32.mrb[0].mxu0
    %738 = vdwg.mxu0
    %v739 = vld [vmem:[#allocation13] sm:$0xff]
    %v740 = vld [vmem:[#allocation13 + $0x8] sm:$0xff]
    %v741 = vld [vmem:[#allocation13 + $0x10] sm:$0xff]
    %v742 = vld [vmem:[#allocation13 + $0x18] sm:$0xff]
    %v743 = vld [vmem:[#allocation13 + $0x20] sm:$0xff]
    %v744 = vld [vmem:[#allocation13 + $0x28] sm:$0xff]
    %v745 = vld [vmem:[#allocation13 + $0x30] sm:$0xff]
    %v746 = vld [vmem:[#allocation13 + $0x38] sm:$0xff]
    %v747 = vld [vmem:[#allocation13 + $0x40] sm:$0xff]
    %v748 = vld [vmem:[#allocation13 + $0x48] sm:$0xff]
    %v749 = vld [vmem:[#allocation13 + $0x50] sm:$0xff]
    %v750 = vld [vmem:[#allocation13 + $0x58] sm:$0xff]
    %v751 = vld [vmem:[#allocation13 + $0x60] sm:$0xff]
    %v752 = vld [vmem:[#allocation13 + $0x68] sm:$0xff]
    %v753 = vld [vmem:[#allocation13 + $0x70] sm:$0xff]
    %v754 = vld [vmem:[#allocation13 + $0x78] sm:$0xff]
    %v755 = vld [vmem:[%s9] sm:$0x1]
    %v757 = vlaneseq
    %v758 = vshrl.u32 %v757, 7
    %v759 = vsub.s32 0, %v758
    %v760 = vrot.slane %v755, %v759
    %762 = vmatprep.subr.mxu0 0.0
    %763 = vmatpush1.msra.mxu0 %v739
    %764 = vmatprep.subr.mxu0 0.0
    %765 = vmatpush1.msra.mxu0 %v740
    %766 = vmatprep.subr.mxu0 0.0
    %767 = vmatpush1.msra.mxu0 %v741
    %768 = vmatprep.subr.mxu0 0.0
    %769 = vmatpush1.msra.mxu0 %v742
    %770 = vmatprep.subr.mxu0 0.0
    %771 = vmatpush1.msra.mxu0 %v743
    %772 = vmatprep.subr.mxu0 0.0
    %773 = vmatpush1.msra.mxu0 %v744
    %774 = vmatprep.subr.mxu0 0.0
    %775 = vmatpush1.msra.mxu0 %v745
    %776 = vmatprep.subr.mxu0 0.0
    %777 = vmatpush1.msra.mxu0 %v746
    %778 = vmatprep.subr.mxu0 0.0
    %779 = vmatpush1.msra.mxu0 %v747
    %780 = vmatprep.subr.mxu0 0.0
    %781 = vmatpush1.msra.mxu0 %v748
    %782 = vmatprep.subr.mxu0 0.0
    %783 = vmatpush1.msra.mxu0 %v749
    %784 = vmatprep.subr.mxu0 0.0
    %785 = vmatpush1.msra.mxu0 %v750
    %786 = vmatprep.subr.mxu0 0.0
    %787 = vmatpush1.msra.mxu0 %v751
    %788 = vmatprep.subr.mxu0 0.0
    %789 = vmatpush1.msra.mxu0 %v752
    %790 = vmatprep.subr.mxu0 0.0
    %791 = vmatpush1.msra.mxu0 %v753
    %792 = vmatprep.subr.mxu0 0.0
    %793 = vmatpush1.msra.mxu0 %v754
    %794 = vmatprep.subr.mxu0 0.0
    %795 = vmatpush1.msra.mxu0 0.0
    %796 = vmatprep.subr.mxu0 0.0
    %797 = vmatpush1.msra.mxu0 0.0
    %798 = vmatprep.subr.mxu0 0.0
    %799 = vmatpush1.msra.mxu0 0.0
    %800 = vmatprep.subr.mxu0 0.0
    %801 = vmatpush1.msra.mxu0 0.0
    %802 = vmatprep.subr.mxu0 0.0
    %803 = vmatpush1.msra.mxu0 0.0
    %804 = vmatprep.subr.mxu0 0.0
    %805 = vmatpush1.msra.mxu0 0.0
    %806 = vmatprep.subr.mxu0 0.0
    %807 = vmatpush1.msra.mxu0 0.0
    %808 = vmatprep.subr.mxu0 0.0
    %809 = vmatpush1.msra.mxu0 0.0
    %810 = vmatprep.subr.mxu0 0.0
    %811 = vmatpush1.msra.mxu0 0.0
    %812 = vmatprep.subr.mxu0 0.0
    %813 = vmatpush1.msra.mxu0 0.0
    %814 = vmatprep.subr.mxu0 0.0
    %815 = vmatpush1.msra.mxu0 0.0
    %816 = vmatprep.subr.mxu0 0.0
    %817 = vmatpush1.msra.mxu0 0.0
    %818 = vmatprep.subr.mxu0 0.0
    %819 = vmatpush1.msra.mxu0 0.0
    %820 = vmatprep.subr.mxu0 0.0
    %821 = vmatpush1.msra.mxu0 0.0
    %822 = vmatprep.subr.mxu0 0.0
    %823 = vmatpush1.msra.mxu0 0.0
    %824 = vmatprep.subr.mxu0 0.0
    %825 = vmatpush1.msra.mxu0 0.0
    %826 = vmatprep.mubr.f32.mxu0 0.0
    %827 = vmatmul.mubr.f32.gmra.mrb[0].mxu0 %v663
    %v828 = vpop.f32.mrb[0].mxu0
    %v829 = vadd.f32 %v760, %v828
    %v830 = vpop.f32.mrb[0].mxu0
    %831 = vmatprep.mubr.f32.mxu0 0.0
    %832 = vmatmul.mubr.f32.gmra.mrb[0].mxu0 %v736
    %v833 = vpop.f32.mrb[0].mxu0
    %v834 = vadd.f32 %v760, %v833
    %v835 = vpop.f32.mrb[0].mxu0
    %836 = vdwg.mxu0
    %v837 = vadd.f32 %v137, %v829
    %v838 = vadd.f32 %v138, %v834
    %839 = vadd.xlane.f32.xlu0 %v837
    %v840 = vpop.xlane.xlu0 %839
    %841 = vadd.xlane.f32.xlu0 %v838
    %v842 = vpop.xlane.xlu0 %841
    %v843 = vrcp.pop 128.0
    %v844 = vmul.f32 %v840, %v843
    %v845 = vmul.f32 %v842, %v843
    %v846 = vsub.f32 %v837, %v844
    %v847 = vsub.f32 %v838, %v845
    %v848 = vmul.f32 %v846, %v846
    %v849 = vmul.f32 %v847, %v847
    %850 = vadd.xlane.f32.xlu0 %v848
    %v851 = vpop.xlane.xlu0 %850
    %852 = vadd.xlane.f32.xlu0 %v849
    %v853 = vpop.xlane.xlu0 %852
    %v854 = vmul.f32 %v851, %v843
    %v855 = vmul.f32 %v853, %v843
    %v856 = vadd.f32 %v854, 1e-05
    %v857 = vadd.f32 %v855, 1e-05
    %v858 = vrsqrt.pop %v856
    %v859 = vrsqrt.pop %v857
    %v860 = vmul.f32 %v846, %v858
    %v861 = vmul.f32 %v847, %v859
    %v862 = vld [vmem:[%s10] sm:$0x1]
    %v864 = vlaneseq
    %v865 = vshrl.u32 %v864, 7
    %v866 = vsub.s32 0, %v865
    %v867 = vrot.slane %v862, %v866
    %v869 = vmul.f32 %v860, %v867
    %v870 = vmul.f32 %v861, %v867
    %v871 = vld [vmem:[%s11] sm:$0x1]
    %v873 = vlaneseq
    %v874 = vshrl.u32 %v873, 7
    %v875 = vsub.s32 0, %v874
    %v876 = vrot.slane %v871, %v875
    %v878 = vadd.f32 %v869, %v876
    %v879 = vadd.f32 %v870, %v876
    %880 = vst [vmem:[#allocation14] sm:$0xff] %v878
    %881 = vst [vmem:[#allocation14 + $0x8] sm:$0xff] %v879
    // Predicated region
    $region78: #{tpu_custom_call.1} parent=1 // pred_check
      _
    $region79: #{tpu_custom_call.1} parent=1 // pred_check_branch
      %883 = sbr.rel (0) target = $region81
    $region80: #{tpu_custom_call.1} parent=1 // pred_region
      %s885 = ssub.s32 256, 256
      %886 = vsyncadd [#allocation4], %s885
      %s887 = sshll.u32 [#allocation14], 4
      %s888 = int_to_ptr.vmem [resolvable:$true] %s887
      %893 = dma.vmem_to_hbm [thread:$0]  %s888, 256, %s12, [#allocation4], 128, 128, 8
    $region81: #{tpu_custom_call.1} parent=1 // pred_fallthru
      _
    // Predicated region
    $region82: #{tpu_custom_call.1} parent=1 // pred_check
      _
    $region83: #{tpu_custom_call.1} parent=1 // pred_check_branch
      %895 = sbr.rel (0) target = $region85
    $region84: #{tpu_custom_call.1} parent=1 // pred_region
      %896 = dma.done [#allocation4], 256
    $region85: #{tpu_custom_call.1} parent=1 // pred_fallthru
      _
    %897 = vsyncpa [#allocation3], 1
    %898 = vsyncpa [#allocation6], 1
    %899 = vsyncpa [#allocation9], 1
    %900 = vsyncpa [#allocation12], 1
    %901 = vsyncpa [#allocation4], 1

</llo_original>
